<compile_context>
chip_gen: v6e
topology: v6e:2x2x1
jax: 0.10.0
libtpu: 0.0.40
codegen_flags: <defaults>
</compile_context>

<pallas_src>
import functools
import math

import jax
import jax.numpy as jnp
from jax.experimental import pallas as pl
from jax.experimental.pallas import tpu as pltpu


def _pos_emb_kernel(x_ref, out_ref, *, half, denom, max_positions):
    # x_ref:   (block_n, 1)   positions for this row-tile
    # out_ref: (block_n, C)   [cos | sin] written as a single full-width cos
    C = out_ref.shape[1]

    # Per-column constants, built in-kernel (no freqs input DMA).
    col = jax.lax.broadcasted_iota(jnp.int32, (1, C), 1)          # 0..C-1
    is_sin = col >= half                                          # second half -> sin
    j = jnp.where(is_sin, col - half, col).astype(jnp.float32)    # frequency index
    # (1/max_positions) ** (j/denom) == exp(-log(max_positions) * j / denom)
    freqs = jnp.exp(j * (-math.log(float(max_positions)) / float(denom)))
    # cos(theta - pi/2) == sin(theta): fold the sin halves into the same cos.
    phase = jnp.where(is_sin, jnp.float32(-0.5 * math.pi), jnp.float32(0.0))

    # Phase accuracy: always accumulate the argument in f32 (VPU broadcast
    # multiply + add; no MXU). The cos itself is the binding EUP work.
    xf = x_ref[...].astype(jnp.float32)                           # (block_n, 1)
    arg = xf * freqs + phase                                      # (block_n, C)
    out_ref[...] = jnp.cos(arg).astype(out_ref.dtype)             # one lane-dense store


def positional_embedding(x, num_channels, max_positions=10000, endpoint=False,
                         block_n=None, out_dtype=None):
    """x: (N,) positions. Returns (N, num_channels) = [cos | sin] embedding."""
    if num_channels % 2 != 0:
        raise ValueError("num_channels must be even")
    half = num_channels // 2
    denom = half - (1 if endpoint else 0)
    if denom <= 0:
        raise ValueError("endpoint=True requires num_channels >= 4")

    n = x.shape[0]
    out_dtype = x.dtype if out_dtype is None else out_dtype

    # Row-tile size: cap the per-block output footprint (~2 MiB) so two
    # double-buffered tiles stay well under the 32 MiB scoped / 64 MiB (v7x)
    # VMEM budget; keep it a multiple of 8 sublanes.
    if block_n is None:
        bytes_per_row = num_channels * 4
        block_n = max(8, min(2048, (2 * 1024 * 1024 // bytes_per_row) // 8 * 8))
    block_n = max(8, (block_n // 8) * 8)
    if n <= block_n:
        block_n = max(8, -(-n // 8) * 8)          # single tile, rounded up to 8 rows

    n_pad = -(-n // block_n) * block_n
    xf = x.astype(jnp.float32)
    if n_pad != n:
        xf = jnp.pad(xf, (0, n_pad - n))
    x2d = xf.reshape(n_pad, 1)

    kernel = functools.partial(
        _pos_emb_kernel, half=half, denom=denom, max_positions=max_positions)

    out = pl.pallas_call(
        kernel,
        out_shape=jax.ShapeDtypeStruct((n_pad, num_channels), out_dtype),
        grid=(n_pad // block_n,),
        in_specs=[pl.BlockSpec((block_n, 1), lambda i: (i, 0))],
        out_specs=pl.BlockSpec((block_n, num_channels), lambda i: (i, 0)),
        compiler_params=pltpu.CompilerParams(dimension_semantics=("parallel",)),
    )(x2d)
    return out[:n]


def _reference(x, num_channels, max_positions=10000, endpoint=False):
    # Faithful plain-JAX port of the PyTorch forward (also the recommended
    # path for tiny N, where a kernel launch is pure overhead).
    half = num_channels // 2
    freqs = jnp.arange(half, dtype=jnp.float32) / (half - (1 if endpoint else 0))
    freqs = (1.0 / max_positions) ** freqs
    arg = jnp.outer(x.astype(jnp.float32), freqs)
    return jnp.concatenate([jnp.cos(arg), jnp.sin(arg)], axis=1).astype(x.dtype)


if __name__ == "__main__":
    key = jax.random.PRNGKey(0)
    k1, k2 = jax.random.split(key)

    # Tolerance note: with positions up to ~1e3 the f32 phase x*freq has an
    # intrinsic quantization of ~ulp(1e3)=6e-5 rad; the in-kernel exp-based
    # freqs and the pi/2 fold add a few more ulp of phase, so values can differ
    # from the pow/sin reference by a few 1e-4. 1e-3 is a safe functional bound.
    TOL = 1e-3

    # Case 1: typical module usage (N = batch of timesteps, C = 32).
    N1, C1 = 8, 32
    x1 = jax.random.uniform(k1, (N1,), dtype=jnp.float32) * 1000.0
    out1 = jax.block_until_ready(positional_embedding(x1, C1))
    ref1 = _reference(x1, C1)
    assert out1.shape == (N1, C1), out1.shape
    assert jnp.max(jnp.abs(out1 - ref1)) < TOL, "mismatch vs reference (case 1)"

    # Case 2: exercise the tiled/padded multi-block path (grid = 3, padding 300->384).
    N2, C2 = 300, 64
    x2 = jax.random.uniform(k2, (N2,), dtype=jnp.float32) * 1000.0
    out2 = jax.block_until_ready(positional_embedding(x2, C2, block_n=128))
    ref2 = _reference(x2, C2)
    assert out2.shape == (N2, C2), out2.shape
    assert jnp.max(jnp.abs(out2 - ref2)) < TOL, "mismatch vs reference (case 2)"

    print("KERNEL_OK")
</pallas_src>

<mosaic_0001>
module attributes {stable_mosaic.version = 11 : i64} {
  func.func @_pos_emb_kernel(%arg0: i32, %arg1: memref<8x1xf32, #tpu.memory_space<vmem>>, %arg2: memref<8x32xf32, #tpu.memory_space<vmem>>) attributes {dimension_semantics = [#tpu.dimension_semantics<parallel>], iteration_bounds = array<i64: 1>, scalar_prefetch = 0 : i64, scratch_operands = 0 : i64, tpu.core_type = #tpu.core_type<tc>, window_params = [{transform_indices = @transform_0, window_bounds = array<i64: 8, 1>}, {transform_indices = @transform_1, window_bounds = array<i64: 8, 32>}]} {
    %0 = tpu.iota {dimensions = array<i32: 1>} : vector<1x32xi32>
    %c16_i32 = arith.constant 16 : i32
    %1 = vector.broadcast %c16_i32 : i32 to vector<1x32xi32>
    %2 = arith.cmpi sge, %0, %1 : vector<1x32xi32>
    %c16_i32_0 = arith.constant 16 : i32
    %3 = vector.broadcast %c16_i32_0 : i32 to vector<1x32xi32>
    %4 = arith.subi %0, %3 : vector<1x32xi32>
    %5 = arith.select %2, %4, %0 : vector<1x32xi1>, vector<1x32xi32>
    %6 = arith.sitofp %5 : vector<1x32xi32> to vector<1x32xf32>
    %cst = arith.constant -0.575646281 : f32
    %7 = vector.broadcast %cst : f32 to vector<1x32xf32>
    %8 = arith.mulf %6, %7 : vector<1x32xf32>
    %9 = math.exp %8 : vector<1x32xf32>
    %cst_1 = arith.constant -1.57079637 : f32
    %cst_2 = arith.constant 0.000000e+00 : f32
    %10 = vector.broadcast %cst_1 : f32 to vector<1x32xf32>
    %11 = vector.broadcast %cst_2 : f32 to vector<1x32xf32>
    %12 = arith.select %2, %10, %11 : vector<1x32xi1>, vector<1x32xf32>
    %c0 = arith.constant 0 : index
    %c0_3 = arith.constant 0 : index
    %13 = vector.load %arg1[%c0, %c0_3] : memref<8x1xf32, #tpu.memory_space<vmem>>, vector<8x1xf32>
    %14 = vector.broadcast %13 : vector<8x1xf32> to vector<8x32xf32>
    %15 = vector.broadcast %9 : vector<1x32xf32> to vector<8x32xf32>
    %16 = arith.mulf %14, %15 : vector<8x32xf32>
    %17 = vector.broadcast %12 : vector<1x32xf32> to vector<8x32xf32>
    %18 = arith.addf %16, %17 : vector<8x32xf32>
    %19 = math.cos %18 : vector<8x32xf32>
    %c0_4 = arith.constant 0 : index
    %c0_5 = arith.constant 0 : index
    %20 = vector.load %arg2[%c0_4, %c0_5] : memref<8x32xf32, #tpu.memory_space<vmem>>, vector<8x32xf32>
    tpu.vector_store %arg2[%c0_4, %c0_5], %19 {strides = array<i32>} : memref<8x32xf32, #tpu.memory_space<vmem>>, vector<8x32xf32>,
    return
  }
  func.func @transform_0(%arg0: i32) -> (i32, i32) {
    %c0_i32 = arith.constant 0 : i32
    %c0_i32_0 = arith.constant 0 : i32
    return %arg0, %c0_i32 : i32, i32
  }
  func.func @transform_1(%arg0: i32) -> (i32, i32) {
    %c0_i32 = arith.constant 0 : i32
    %c0_i32_0 = arith.constant 0 : i32
    return %arg0, %c0_i32 : i32, i32
  }
}

</mosaic_0001>

<llo_original>
// kernel: tpu_custom_call.1
$region0: #{tpu_custom_call.1}
  #allocation0 [shape = 'u32[]', space=smem, size = 0x4, offset = 0x4, fixed_abs, tag = 'smem constant byte address 0x4 - core index']
  #allocation1 [shape = 'u32[144,128]{1,0:T(1,128)}', space=vmem, size = 0x12000, scoped, tag = 'internal scratch']
  %s0 = inlined_call_operand.vmem [shape: f32[8,1], index: 0, kind: input, shape index: {}]
  %s1 = inlined_call_operand.hbm [shape: f32[8,32], index: 1, kind: output, shape index: {}]
  %s2 = sld [smem:[#allocation0]]
  $region14: #{tpu_custom_call.1} parent=0
    _
  %s4 = ssub.s32 1, %s2
  %s5 = scalar_select 0, %s4, %s2
  $region1: #{tpu_custom_call.1} parent=0
    #allocation2 [shape = 'u8[4096]{0}', space=vmem, size = 0x1000, scoped, tag = 'output window, operand 0, single buffered']
    #allocation3 [shape = 's32[1]{0}', space=sflag, size = 0x4, scoped, tag = 'scoped memory for tpu_custom_call.1']
    %6 = vsyncpa [#allocation3], 0
    // Predicated region
    $region2: #{tpu_custom_call.1} parent=1 // pred_check
      _
    $region3: #{tpu_custom_call.1} parent=1 // pred_check_branch
      %8 = sbr.rel (0) target = $region5
    $region4: #{tpu_custom_call.1} parent=1 // pred_region
      _
    $region5: #{tpu_custom_call.1} parent=1 // pred_fallthru
      _
    %v9 = vlaneseq
    %v10 = vand.u32 %v9, 127
    %vm11 = vcmp.ge.s32.totalorder %v10, 16
    %v12 = vsub.s32 %v10, 16
    %v13 = vsel %vm11, %v12, %v10
    %v14 = vcvt.s32.f32 %v13
    %v15 = vmul.f32 %v14, -0.5756463
    %v16 = vmul.f32 %v15, 1.442695
    %v17 = vpow.pop %v16
    %v18 = vsel %vm11, -1.5707964, 0.0
    %v19 = vld [vmem:[%s0] sm:$0xff]
    %21 = vset.pattern.permute.xlu0 0
    %22 = vperm.xlu0 %21, %v19
    %v23 = vpop.permute.xlu0 %22
    %v25 = vmul.f32 %v23, %v17
    %v26 = vadd.f32 %v25, %v18
    %v27 = vand.u32 2147483647, %v26
    %vm28 = vcmp.le.f32.partialorder %v27, 0.7853982
    %vm29 = vcmp.lt.s32.totalorder %v26, 0
    %v30 = vand.u32 %v26, 2139095040
    %v31 = vshrl.u32 %v30, 23
    %v32 = vsub.s32 %v31, 127
    %v33 = vand.u32 2147483647, %v26
    %v34 = vand.u32 %v33, 8388607
    %v35 = vor.u32 %v34, 8388608
    %v36 = vsub.s32 0, %v35
    %v37 = vadd.s32 %v32, 1
    %vm38 = vcmp.gt.s32.totalorder %v37, 0
    %v39 = vsel %vm38, %v37, 0
    %v40 = vshrl.u32 %v39, 5
    %v41 = vand.u32 %v39, 31
    %v42 = vsub.s32 32, %v41
    %v43 = vshrl.u32 683565275, %v42
    %v44 = vshll.u32 683565275, %v41
    %v45 = vshrl.u32 2475754826, %v42
    %v46 = vor.u32 %v44, %v45
    %v47 = vshll.u32 2475754826, %v41
    %v48 = vshrl.u32 2131351028, %v42
    %v49 = vor.u32 %v47, %v48
    %v50 = vshll.u32 2131351028, %v41
    %v51 = vshrl.u32 2102212464, %v42
    %v52 = vor.u32 %v50, %v51
    %v53 = vshll.u32 2102212464, %v41
    %v54 = vshrl.u32 920167782, %v42
    %v55 = vor.u32 %v53, %v54
    %v56 = vshll.u32 920167782, %v41
    %v57 = vshrl.u32 1326507024, %v42
    %v58 = vor.u32 %v56, %v57
    %vm59 = vcmp.lt.s32.totalorder %v40, 1
    %vm60 = vcmp.lt.s32.totalorder %v40, 2
    %vm61 = vcmp.lt.s32.totalorder %v40, 3
    %vm62 = vcmp.lt.s32.totalorder %v40, 4
    %v63 = vsel %vm59, %v43, %v46
    %v64 = vsel %vm62, %v52, 2102212464
    %v65 = vsel %vm61, %v49, %v64
    %v66 = vsel %vm60, %v63, %v65
    %v67 = vsel %vm59, %v46, %v49
    %v68 = vsel %vm62, %v55, 920167782
    %v69 = vsel %vm61, %v52, %v68
    %v70 = vsel %vm60, %v67, %v69
    %v71 = vsel %vm59, %v49, %v52
    %v72 = vsel %vm62, %v58, 1326507024
    %v73 = vsel %vm61, %v55, %v72
    %v74 = vsel %vm60, %v71, %v73
    %v75 = vshll.u32 %v35, 8
    %v76 = vmul.u32.u64.compose %v75, %v74
    %v77 = vextract.low.u32 %v76
    %v78 = vextract.high.u32 %v76
    %v79 = vmul.u32.u64.compose %v75, %v70
    %v80 = vextract.low.u32 %v79
    %v81 = vextract.high.u32 %v79
    %v82 = vmul.u32 %v75, %v66
    %v83 = vadd.s32 %v78, %v80
    %vm84 = vc.u32 %v78, %v80
    %v85 = vadd.s32 %v81, 1
    %v86 = vsel %vm84, %v85, %v81
    %v87 = vadd.s32 %v82, %v86
    %v88 = vadd.s32 %v87, 536870912
    %v89 = vshrl.u32 %v88, 30
    %v90 = vshll.u32 %v89, 30
    %v91 = vsub.s32 %v87, %v90
    %vm92 = vcmp.lt.s32.totalorder %v91, 0
    %v93 = vsub.s32 0, %v91
    %v94 = vsel %vm92, %v93, %v91
    %v95 = vclz %v94
    %v96 = vsub.s32 %v95, 2
    %vm97 = vcmp.gt.s32.totalorder 0, %v96
    %v98 = vsel %vm97, 0, %v96
    %v99 = vsub.s32 32, %v98
    %v100 = vshll.u32 %v91, %v98
    %v101 = vshrl.u32 %v83, %v99
    %v102 = vor.u32 %v100, %v101
    %v103 = vsub.s32 4294967266, %v98
    %v104 = vadd.s32 %v103, 127
    %v105 = vshll.u32 %v104, 23
    %v106 = vor.u32 4788187, %v105
    %v107 = vand.u32 2147483647, %v106
    %v109 = vcvt.s32.f32 %v102
    %v110 = vmul.f32 %v109, %v107
    %v111 = vxor.u32 %v110, 2147483648
    %v112 = vsel %vm29, %v111, %v110
    %v113 = vsub.s32 4, %v89
    %v114 = vsel %vm29, %v113, %v89
    %v115 = vsel %vm28, %v26, %v112
    %v116 = vsel %vm28, 0, %v114
    %v117 = vcosq.f32.pop %v115
    %v118 = vsinq.f32.pop %v115
    %vm119 = vweird.f32 %v26
    %v120 = vand.u32 %v116, 3
    %vm121 = vcmp.lt.s32.totalorder %v120, 2
    %vm122 = vcmp.eq.s32.totalorder %v120, 0
    %v123 = vxor.u32 %v118, 2147483648
    %v124 = vsel %vm122, %v117, %v123
    %vm125 = vcmp.eq.s32.totalorder %v120, 2
    %v126 = vxor.u32 %v117, 2147483648
    %v127 = vsel %vm125, %v126, %v118
    %v128 = vsel %vm121, %v124, %v127
    %v129 = vsel %vm119, nan, %v128
    %vm130 = vcmask 261120
    %131 = vst.msk [vmem:[#allocation2] sm:$0xff] %vm130, %v129
    // Predicated region
    $region6: #{tpu_custom_call.1} parent=1 // pred_check
      _
    $region7: #{tpu_custom_call.1} parent=1 // pred_check_branch
      %133 = sbr.rel (0) target = $region9
    $region8: #{tpu_custom_call.1} parent=1 // pred_region
      %s135 = ssub.s32 128, 128
      %136 = vsyncadd [#allocation3], %s135
      %s138 = sshll.u32 [#allocation2], 4
      %s139 = int_to_ptr.vmem [resolvable:$true] %s138
      %141 = dma.vmem_to_hbm [thread:$0]  %s139, 128, %s1, [#allocation3]
    $region9: #{tpu_custom_call.1} parent=1 // pred_fallthru
      _
    // Predicated region
    $region10: #{tpu_custom_call.1} parent=1 // pred_check
      _
    $region11: #{tpu_custom_call.1} parent=1 // pred_check_branch
      %143 = sbr.rel (0) target = $region13
    $region12: #{tpu_custom_call.1} parent=1 // pred_region
      %144 = dma.done [#allocation3], 128
    $region13: #{tpu_custom_call.1} parent=1 // pred_fallthru
      _
    %145 = vsyncpa [#allocation3], 1

</llo_original>
